<compile_context>
chip_gen: v6e
topology: v6e:2x2x1
jax: 0.10.0
libtpu: 0.0.40
codegen_flags: <defaults>
</compile_context>

<pallas_src>
import functools

import jax
import jax.numpy as jnp
from jax.experimental import pallas as pl
from jax.experimental.pallas import tpu as pltpu

LN_EPS = 1e-5               # PyTorch nn.LayerNorm default
_ONEHOT_MAX_USERS = 4096    # above this, switch to the per-row DMA gather


def _round_up(x: int, m: int) -> int:
    return ((x + m - 1) // m) * m


# ----------------------------------------------------------------------------
# Stage 1: fused  emb_table @ W^T + b -> ReLU -> LayerNorm*gamma+beta  -> [U, H]
# ----------------------------------------------------------------------------
def _build_table_kernel(emb_ref, w_ref, p_ref, o_ref):
    """emb_ref: (TU, D), w_ref: (D, H), p_ref: (3, H) = [bias; gamma; beta], o_ref: (TU, H)."""
    x = emb_ref[...]
    h = jnp.dot(x, w_ref[...], preferred_element_type=jnp.float32)   # (TU, H) f32
    p = p_ref[...]
    bias, gamma, beta = p[0:1, :], p[1:2, :], p[2:3, :]
    h = jnp.maximum(h + bias, 0.0)
    # LayerNorm over hidden dim (biased variance, torch semantics), f32 epilogue.
    mean = jnp.mean(h, axis=-1, keepdims=True)
    centered = h - mean
    var = jnp.mean(centered * centered, axis=-1, keepdims=True)
    norm = centered * jax.lax.rsqrt(var + LN_EPS)
    o_ref[...] = (norm * gamma + beta).astype(o_ref.dtype)


def _build_repr_table(emb_table, w_t, params):
    U, D = emb_table.shape
    H = w_t.shape[1]
    tile_u = U if U <= 512 else 512
    u_pad = _round_up(U, tile_u)
    if u_pad != U:
        emb_table = jnp.pad(emb_table, ((0, u_pad - U), (0, 0)))

    table = pl.pallas_call(
        _build_table_kernel,
        out_shape=jax.ShapeDtypeStruct((u_pad, H), jnp.float32),
        grid_spec=pltpu.PrefetchScalarGridSpec(
            num_scalar_prefetch=0,
            grid=(u_pad // tile_u,),
            in_specs=[
                pl.BlockSpec((tile_u, D), lambda i: (i, 0)),   # user-embedding rows tile
                pl.BlockSpec((D, H), lambda i: (0, 0)),        # Linear weight (resident)
                pl.BlockSpec((3, H), lambda i: (0, 0)),        # packed bias/gamma/beta
            ],
            out_specs=pl.BlockSpec((tile_u, H), lambda i: (i, 0)),
        ),
        compiler_params=pltpu.CompilerParams(dimension_semantics=("parallel",)),
    )(emb_table, w_t, params)
    return table[:U] if u_pad != U else table


# ----------------------------------------------------------------------------
# Stage 2a: small-U gather  --  onehot(ids) @ repr_table  (single MXU matmul)
# ----------------------------------------------------------------------------
def _gather_onehot_kernel(ids_ref, table_ref, o_ref):
    """ids_ref: (TB, 1) int32, table_ref: (U, H) resident, o_ref: (TB, H)."""
    ids = ids_ref[...]
    tb = ids.shape[0]
    table = table_ref[...]
    u = table.shape[0]
    row_iota = jax.lax.broadcasted_iota(jnp.int32, (tb, u), 1)
    onehot = (row_iota == ids).astype(table.dtype)                     # (TB, U)
    o_ref[...] = jnp.dot(onehot, table,
                         preferred_element_type=jnp.float32).astype(o_ref.dtype)


def _pick_tile_b(batch: int) -> int:
    """Batch tile: single padded tile for small B, 256 (grid >= 2, megacore-friendly,
    VMEM-safe at any B) otherwise."""
    if batch <= 256:
        return max(8, _round_up(batch, 8))
    return 256


def _gather_onehot(user_ids, repr_table, tile_b):
    B = user_ids.shape[0]
    U, H = repr_table.shape
    if tile_b is None:
        tile_b = _pick_tile_b(B)
    b_pad = _round_up(B, tile_b)

    ids2 = user_ids.astype(jnp.int32).reshape(B, 1)
    if b_pad != B:
        ids2 = jnp.pad(ids2, ((0, b_pad - B), (0, 0)))   # padded ids -> row 0, sliced off

    out = pl.pallas_call(
        _gather_onehot_kernel,
        out_shape=jax.ShapeDtypeStruct((b_pad, H), jnp.float32),
        grid_spec=pltpu.PrefetchScalarGridSpec(
            num_scalar_prefetch=0,
            grid=(b_pad // tile_b,),
            in_specs=[
                pl.BlockSpec((tile_b, 1), lambda i: (i, 0)),   # ids tile
                pl.BlockSpec((U, H), lambda i: (0, 0)),        # repr table (resident)
            ],
            out_specs=pl.BlockSpec((tile_b, H), lambda i: (i, 0)),
        ),
        compiler_params=pltpu.CompilerParams(
            dimension_semantics=("parallel",),   # shards batch tiles across v7x's 2 TCs
        ),
    )(ids2, repr_table)
    return out[:B] if b_pad != B else out


# ----------------------------------------------------------------------------
# Stage 2b: large-U gather  --  scalar-prefetched ids + per-row Element BlockSpec
# ----------------------------------------------------------------------------
def _gather_rows_kernel(ids_smem_ref, row_ref, o_ref):
    del ids_smem_ref  # only used by the index maps
    o_ref[...] = row_ref[...]


def _gather_rows(user_ids, repr_table):
    B = user_ids.shape[0]
    U, H = repr_table.shape
    ids = jnp.clip(user_ids.astype(jnp.int32), 0, U - 1)   # keep row DMAs in-bounds
    return pl.pallas_call(
        _gather_rows_kernel,
        out_shape=jax.ShapeDtypeStruct((B, H), jnp.float32),
        grid_spec=pltpu.PrefetchScalarGridSpec(
            num_scalar_prefetch=1,
            grid=(B,),
            in_specs=[
                pl.BlockSpec((pl.Element(1), H), lambda i, ids_ref: (ids_ref[i], 0)),
            ],
            out_specs=pl.BlockSpec((1, H), lambda i, ids_ref: (i, 0)),
        ),
        compiler_params=pltpu.CompilerParams(dimension_semantics=("arbitrary",)),
    )(ids, repr_table)


# ----------------------------------------------------------------------------
# Top-level forward
# ----------------------------------------------------------------------------
@functools.partial(jax.jit, static_argnames=("tile_b",))
def user_id_representation(user_ids, emb_table, w_t, bias, gamma, beta, *, tile_b=None):
    """Eval-mode forward of UserIDRepresentation.

    user_ids:  [B] int32
    emb_table: [num_users, D]  (row 0 zeros -> padding_idx=0)
    w_t:       [D, H]  transposed nn.Linear weight
    bias, gamma, beta: [H]
    returns:   [B, H] float32
    """
    H = w_t.shape[1]
    params = jnp.stack(
        [bias.astype(jnp.float32), gamma.astype(jnp.float32), beta.astype(jnp.float32)],
        axis=0,
    ).reshape(3, H)

    repr_table = _build_repr_table(emb_table, w_t, params)      # [U, H] f32

    U = emb_table.shape[0]
    if U <= _ONEHOT_MAX_USERS:
        return _gather_onehot(user_ids, repr_table, tile_b)
    return _gather_rows(user_ids, repr_table)


def _reference(user_ids, emb_table, w_t, bias, gamma, beta):
    x = jnp.take(emb_table, user_ids, axis=0)
    h = x @ w_t + bias
    h = jnp.maximum(h, 0.0)
    mean = jnp.mean(h, axis=-1, keepdims=True)
    var = jnp.mean((h - mean) ** 2, axis=-1, keepdims=True)
    return (h - mean) * jax.lax.rsqrt(var + LN_EPS) * gamma + beta


if __name__ == "__main__":
    # Small config consistent with the module.
    num_users = 64
    id_embedding_dim = 32
    hidden_size = 128
    batch_size = 16

    key = jax.random.PRNGKey(0)
    k_emb, k_w, k_b, k_ids = jax.random.split(key, 4)

    emb_table = 0.02 * jax.random.normal(
        k_emb, (num_users, id_embedding_dim), dtype=jnp.float32
    )
    emb_table = emb_table.at[0].set(0.0)  # padding_idx=0 -> zero row

    # nn.Linear(id_embedding_dim, hidden_size): weight [H, D]; stored transposed [D, H].
    w_t = 0.05 * jax.random.normal(
        k_w, (id_embedding_dim, hidden_size), dtype=jnp.float32
    )
    bias = 0.01 * jax.random.normal(k_b, (hidden_size,), dtype=jnp.float32)

    # nn.LayerNorm(hidden_size) default init.
    gamma = jnp.ones((hidden_size,), dtype=jnp.float32)
    beta = jnp.zeros((hidden_size,), dtype=jnp.float32)

    user_ids = jax.random.randint(k_ids, (batch_size,), 0, num_users, dtype=jnp.int32)
    user_ids = user_ids.at[0].set(0)  # exercise padding_idx path

    out = user_id_representation(user_ids, emb_table, w_t, bias, gamma, beta)
    out = jax.block_until_ready(out)

    ref = _reference(user_ids, emb_table, w_t, bias, gamma, beta)
    assert out.shape == (batch_size, hidden_size)
    assert jnp.allclose(out, ref, atol=1e-4, rtol=1e-4), "mismatch vs JAX reference"

    print("KERNEL_OK")
</pallas_src>

<mosaic_0001>
module attributes {stable_mosaic.version = 11 : i64} {
  func.func @_build_table_kernel(%arg0: i32, %arg1: memref<64x32xf32, #tpu.memory_space<vmem>>, %arg2: memref<32x128xf32, #tpu.memory_space<vmem>>, %arg3: memref<3x128xf32, #tpu.memory_space<vmem>>, %arg4: memref<64x128xf32, #tpu.memory_space<vmem>>) attributes {dimension_semantics = [#tpu.dimension_semantics<parallel>], iteration_bounds = array<i64: 1>, scalar_prefetch = 0 : i64, scratch_operands = 0 : i64, tpu.core_type = #tpu.core_type<tc>, window_params = [{transform_indices = @transform_0, window_bounds = array<i64: 64, 32>}, {pipeline_mode = #tpu.pipeline_mode<synchronous>, transform_indices = @transform_1, window_bounds = array<i64: 32, 128>}, {pipeline_mode = #tpu.pipeline_mode<synchronous>, transform_indices = @transform_2, window_bounds = array<i64: 3, 128>}, {transform_indices = @transform_3, window_bounds = array<i64: 64, 128>}]} {
    %c0 = arith.constant 0 : index
    %c0_0 = arith.constant 0 : index
    %0 = vector.load %arg1[%c0, %c0_0] : memref<64x32xf32, #tpu.memory_space<vmem>>, vector<64x32xf32>
    %c0_1 = arith.constant 0 : index
    %c0_2 = arith.constant 0 : index
    %1 = vector.load %arg2[%c0_1, %c0_2] : memref<32x128xf32, #tpu.memory_space<vmem>>, vector<32x128xf32>
    %cst = arith.constant dense<0.000000e+00> : vector<64x128xf32>
    %2 = tpu.matmul %0, %1, %cst {dimension_numbers = #tpu.dot_dimension_numbers<[1], [0], [0], [1], [0, 0, 1, 1], [], []>} : vector<64x32xf32>, vector<32x128xf32>, vector<64x128xf32> -> vector<64x128xf32>
    %c0_3 = arith.constant 0 : index
    %c0_4 = arith.constant 0 : index
    %3 = vector.load %arg3[%c0_3, %c0_4] : memref<3x128xf32, #tpu.memory_space<vmem>>, vector<3x128xf32>
    %4 = vector.extract_strided_slice %3 {offsets = [0, 0], sizes = [1, 128], strides = [1, 1]} : vector<3x128xf32> to vector<1x128xf32>
    %5 = vector.extract_strided_slice %3 {offsets = [1, 0], sizes = [1, 128], strides = [1, 1]} : vector<3x128xf32> to vector<1x128xf32>
    %6 = vector.extract_strided_slice %3 {offsets = [2, 0], sizes = [1, 128], strides = [1, 1]} : vector<3x128xf32> to vector<1x128xf32>
    %7 = vector.broadcast %4 : vector<1x128xf32> to vector<64x128xf32>
    %8 = arith.addf %2, %7 : vector<64x128xf32>
    %cst_5 = arith.constant 0.000000e+00 : f32
    %9 = vector.broadcast %cst_5 : f32 to vector<64x128xf32>
    %10 = arith.maximumf %8, %9 : vector<64x128xf32>
    %cst_6 = arith.constant dense<0.000000e+00> : vector<64xf32>
    %11 = vector.multi_reduction <add>, %10, %cst_6 [1] : vector<64x128xf32> to vector<64xf32>
    %12 = vector.shape_cast %11 : vector<64xf32> to vector<64x1xf32>
    %cst_7 = arith.constant 1.280000e+02 : f32
    %13 = vector.broadcast %cst_7 : f32 to vector<64x1xf32>
    %14 = arith.divf %12, %13 : vector<64x1xf32>
    %15 = vector.broadcast %14 : vector<64x1xf32> to vector<64x128xf32>
    %16 = arith.subf %10, %15 : vector<64x128xf32>
    %17 = arith.mulf %16, %16 : vector<64x128xf32>
    %cst_8 = arith.constant dense<0.000000e+00> : vector<64xf32>
    %18 = vector.multi_reduction <add>, %17, %cst_8 [1] : vector<64x128xf32> to vector<64xf32>
    %19 = vector.shape_cast %18 : vector<64xf32> to vector<64x1xf32>
    %cst_9 = arith.constant 1.280000e+02 : f32
    %20 = vector.broadcast %cst_9 : f32 to vector<64x1xf32>
    %21 = arith.divf %19, %20 : vector<64x1xf32>
    %cst_10 = arith.constant 9.99999974E-6 : f32
    %22 = vector.broadcast %cst_10 : f32 to vector<64x1xf32>
    %23 = arith.addf %21, %22 : vector<64x1xf32>
    %24 = math.rsqrt %23 : vector<64x1xf32>
    %25 = vector.broadcast %24 : vector<64x1xf32> to vector<64x128xf32>
    %26 = arith.mulf %16, %25 : vector<64x128xf32>
    %27 = vector.broadcast %5 : vector<1x128xf32> to vector<64x128xf32>
    %28 = arith.mulf %26, %27 : vector<64x128xf32>
    %29 = vector.broadcast %6 : vector<1x128xf32> to vector<64x128xf32>
    %30 = arith.addf %28, %29 : vector<64x128xf32>
    %c0_11 = arith.constant 0 : index
    %c0_12 = arith.constant 0 : index
    %31 = vector.load %arg4[%c0_11, %c0_12] : memref<64x128xf32, #tpu.memory_space<vmem>>, vector<64x128xf32>
    tpu.vector_store %arg4[%c0_11, %c0_12], %30 {strides = array<i32>} : memref<64x128xf32, #tpu.memory_space<vmem>>, vector<64x128xf32>,
    return
  }
  func.func @transform_0(%arg0: i32) -> (i32, i32) {
    %c0_i32 = arith.constant 0 : i32
    %c0_i32_0 = arith.constant 0 : i32
    return %arg0, %c0_i32 : i32, i32
  }
  func.func @transform_1(%arg0: i32) -> (i32, i32) {
    %c0_i32 = arith.constant 0 : i32
    %c0_i32_0 = arith.constant 0 : i32
    %c0_i32_1 = arith.constant 0 : i32
    return %c0_i32, %c0_i32_0 : i32, i32
  }
  func.func @transform_2(%arg0: i32) -> (i32, i32) {
    %c0_i32 = arith.constant 0 : i32
    %c0_i32_0 = arith.constant 0 : i32
    %c0_i32_1 = arith.constant 0 : i32
    return %c0_i32, %c0_i32_0 : i32, i32
  }
  func.func @transform_3(%arg0: i32) -> (i32, i32) {
    %c0_i32 = arith.constant 0 : i32
    %c0_i32_0 = arith.constant 0 : i32
    return %arg0, %c0_i32 : i32, i32
  }
}

module attributes {stable_mosaic.version = 11 : i64} {
  func.func @_gather_onehot_kernel(%arg0: i32, %arg1: memref<16x1xi32, #tpu.memory_space<vmem>>, %arg2: memref<64x128xf32, #tpu.memory_space<vmem>>, %arg3: memref<16x128xf32, #tpu.memory_space<vmem>>) attributes {dimension_semantics = [#tpu.dimension_semantics<parallel>], iteration_bounds = array<i64: 1>, scalar_prefetch = 0 : i64, scratch_operands = 0 : i64, tpu.core_type = #tpu.core_type<tc>, window_params = [{transform_indices = @transform_0, window_bounds = array<i64: 16, 1>}, {pipeline_mode = #tpu.pipeline_mode<synchronous>, transform_indices = @transform_1, window_bounds = array<i64: 64, 128>}, {transform_indices = @transform_2, window_bounds = array<i64: 16, 128>}]} {
    %c0 = arith.constant 0 : index
    %c0_0 = arith.constant 0 : index
    %0 = vector.load %arg1[%c0, %c0_0] : memref<16x1xi32, #tpu.memory_space<vmem>>, vector<16x1xi32>
    %c0_1 = arith.constant 0 : index
    %c0_2 = arith.constant 0 : index
    %1 = vector.load %arg2[%c0_1, %c0_2] : memref<64x128xf32, #tpu.memory_space<vmem>>, vector<64x128xf32>
    %2 = tpu.iota {dimensions = array<i32: 1>} : vector<16x64xi32>
    %3 = vector.broadcast %0 : vector<16x1xi32> to vector<16x64xi32>
    %4 = arith.cmpi eq, %2, %3 : vector<16x64xi32>
    %5 = arith.extui %4 : vector<16x64xi1> to vector<16x64xi32>
    %6 = arith.sitofp %5 : vector<16x64xi32> to vector<16x64xf32>
    %cst = arith.constant dense<0.000000e+00> : vector<16x128xf32>
    %7 = tpu.matmul %6, %1, %cst {dimension_numbers = #tpu.dot_dimension_numbers<[1], [0], [0], [1], [0, 0, 1, 1], [], []>} : vector<16x64xf32>, vector<64x128xf32>, vector<16x128xf32> -> vector<16x128xf32>
    %c0_3 = arith.constant 0 : index
    %c0_4 = arith.constant 0 : index
    %8 = vector.load %arg3[%c0_3, %c0_4] : memref<16x128xf32, #tpu.memory_space<vmem>>, vector<16x128xf32>
    tpu.vector_store %arg3[%c0_3, %c0_4], %7 {strides = array<i32>} : memref<16x128xf32, #tpu.memory_space<vmem>>, vector<16x128xf32>,
    return
  }
  func.func @transform_0(%arg0: i32) -> (i32, i32) {
    %c0_i32 = arith.constant 0 : i32
    %c0_i32_0 = arith.constant 0 : i32
    return %arg0, %c0_i32 : i32, i32
  }
  func.func @transform_1(%arg0: i32) -> (i32, i32) {
    %c0_i32 = arith.constant 0 : i32
    %c0_i32_0 = arith.constant 0 : i32
    %c0_i32_1 = arith.constant 0 : i32
    return %c0_i32, %c0_i32_0 : i32, i32
  }
  func.func @transform_2(%arg0: i32) -> (i32, i32) {
    %c0_i32 = arith.constant 0 : i32
    %c0_i32_0 = arith.constant 0 : i32
    return %arg0, %c0_i32 : i32, i32
  }
}

</mosaic_0001>

<llo_original>
// kernel: user_id_representation.3
$region0: #{user_id_representation.3}
  #allocation0 [shape = 'u32[]', space=smem, size = 0x4, offset = 0x4, fixed_abs, tag = 'smem constant byte address 0x4 - core index']
  #allocation1 [shape = 'u32[144,128]{1,0:T(1,128)}', space=vmem, size = 0x12000, scoped, tag = 'internal scratch']
  %s0 = inlined_call_operand.vmem [shape: s32[16,1], index: 0, kind: input, shape index: {}]
  %s1 = inlined_call_operand.vmem [shape: f32[64,128], index: 1, kind: input, shape index: {}]
  %s2 = inlined_call_operand.hbm [shape: f32[16,128], index: 2, kind: output, shape index: {}]
  %s3 = sld [smem:[#allocation0]]
  $region18: #{user_id_representation.3} parent=0
    _
  %s5 = ssub.s32 1, %s3
  %s6 = scalar_select 0, %s5, %s3
  $region1: #{user_id_representation.3} parent=0
    #allocation2 [shape = 'u8[8192]{0}', space=vmem, size = 0x2000, scoped, tag = 'output window, operand 0, single buffered']
    #allocation3 [shape = 's32[1]{0}', space=sflag, size = 0x4, scoped, tag = 'scoped memory for user_id_representation.3']
    %7 = vsyncpa [#allocation3], 0
    // Predicated region
    $region2: #{user_id_representation.3} parent=1 // pred_check
      _
    $region3: #{user_id_representation.3} parent=1 // pred_check_branch
      %9 = sbr.rel (0) target = $region5
    $region4: #{user_id_representation.3} parent=1 // pred_region
      _
    $region5: #{user_id_representation.3} parent=1 // pred_fallthru
      _
    // Predicated region
    $region6: #{user_id_representation.3} parent=1 // pred_check
      _
    $region7: #{user_id_representation.3} parent=1 // pred_check_branch
      %11 = sbr.rel (0) target = $region9
    $region8: #{user_id_representation.3} parent=1 // pred_region
      _
    $region9: #{user_id_representation.3} parent=1 // pred_fallthru
      _
    %v12 = vld [vmem:[%s0] sm:$0xff]
    %v13 = vld [vmem:[%s0 + $0x8] sm:$0xff]
    %v14 = vld [vmem:[%s1] sm:$0xff]
    %v15 = vld [vmem:[%s1 + $0x8] sm:$0xff]
    %v16 = vld [vmem:[%s1 + $0x10] sm:$0xff]
    %v17 = vld [vmem:[%s1 + $0x18] sm:$0xff]
    %v18 = vld [vmem:[%s1 + $0x20] sm:$0xff]
    %v19 = vld [vmem:[%s1 + $0x28] sm:$0xff]
    %v20 = vld [vmem:[%s1 + $0x30] sm:$0xff]
    %v21 = vld [vmem:[%s1 + $0x38] sm:$0xff]
    %v22 = vlaneseq
    %v23 = vand.u32 %v22, 127
    %24 = vset.pattern.permute.xlu0 0
    %25 = vperm.xlu0 %24, %v12
    %v26 = vpop.permute.xlu0 %25
    %27 = vset.pattern.permute.xlu0 0
    %28 = vperm.xlu0 %27, %v13
    %v29 = vpop.permute.xlu0 %28
    %vm30 = vcmp.eq.s32.totalorder %v23, %v26
    %vm31 = vcmp.eq.s32.totalorder %v23, %v29
    %v32 = vsel %vm30, 1, 0
    %v33 = vsel %vm31, 1, 0
    %v34 = vcvt.s32.f32 %v32
    %v35 = vcvt.s32.f32 %v33
    %vm36 = vcmask 523264
    %v38 = vsel %vm36, %v34, 0
    %v41 = vsel %vm36, %v35, 0
    %43 = vmatprep.subr.mxu0 0.0
    %44 = vmatpush1.msra.mxu0 0.0
    %45 = vmatprep.subr.mxu0 0.0
    %46 = vmatpush1.msra.mxu0 0.0
    %47 = vmatprep.subr.mxu0 0.0
    %48 = vmatpush1.msra.mxu0 0.0
    %49 = vmatprep.subr.mxu0 0.0
    %50 = vmatpush1.msra.mxu0 0.0
    %51 = vmatprep.subr.mxu0 0.0
    %52 = vmatpush1.msra.mxu0 0.0
    %53 = vmatprep.subr.mxu0 0.0
    %54 = vmatpush1.msra.mxu0 0.0
    %55 = vmatprep.subr.mxu0 0.0
    %56 = vmatpush1.msra.mxu0 0.0
    %57 = vmatprep.subr.mxu0 0.0
    %58 = vmatpush1.msra.mxu0 0.0
    %59 = vmatprep.subr.mxu0 0.0
    %60 = vmatpush1.msra.mxu0 %v21
    %61 = vmatprep.subr.mxu0 0.0
    %62 = vmatpush1.msra.mxu0 %v20
    %63 = vmatprep.subr.mxu0 0.0
    %64 = vmatpush1.msra.mxu0 %v19
    %65 = vmatprep.subr.mxu0 0.0
    %66 = vmatpush1.msra.mxu0 %v18
    %67 = vmatprep.subr.mxu0 0.0
    %68 = vmatpush1.msra.mxu0 %v17
    %69 = vmatprep.subr.mxu0 0.0
    %70 = vmatpush1.msra.mxu0 %v16
    %71 = vmatprep.subr.mxu0 0.0
    %72 = vmatpush1.msra.mxu0 %v15
    %73 = vmatprep.subr.mxu0 0.0
    %74 = vmatpush1.msra.mxu0 %v14
    %75 = vmatprep.subr.mxu0 0.0
    %76 = vmatpush2.msra.mxu0 0.0
    %77 = vmatprep.subr.mxu0 0.0
    %78 = vmatpush2.msra.mxu0 0.0
    %79 = vmatprep.subr.mxu0 0.0
    %80 = vmatpush2.msra.mxu0 0.0
    %81 = vmatprep.subr.mxu0 0.0
    %82 = vmatpush2.msra.mxu0 0.0
    %83 = vmatprep.subr.mxu0 0.0
    %84 = vmatpush2.msra.mxu0 0.0
    %85 = vmatprep.subr.mxu0 0.0
    %86 = vmatpush2.msra.mxu0 0.0
    %87 = vmatprep.subr.mxu0 0.0
    %88 = vmatpush2.msra.mxu0 0.0
    %89 = vmatprep.subr.mxu0 0.0
    %90 = vmatpush2.msra.mxu0 0.0
    %91 = vmatprep.subr.mxu0 0.0
    %92 = vmatpush2.msra.mxu0 0.0
    %93 = vmatprep.subr.mxu0 0.0
    %94 = vmatpush2.msra.mxu0 0.0
    %95 = vmatprep.subr.mxu0 0.0
    %96 = vmatpush2.msra.mxu0 0.0
    %97 = vmatprep.subr.mxu0 0.0
    %98 = vmatpush2.msra.mxu0 0.0
    %99 = vmatprep.subr.mxu0 0.0
    %100 = vmatpush2.msra.mxu0 0.0
    %101 = vmatprep.subr.mxu0 0.0
    %102 = vmatpush2.msra.mxu0 0.0
    %103 = vmatprep.subr.mxu0 0.0
    %104 = vmatpush2.msra.mxu0 0.0
    %105 = vmatprep.subr.mxu0 0.0
    %106 = vmatpush2.msra.mxu0 0.0
    %107 = vmatprep.mubr.f32.mxu0 0.0
    %108 = vmatmul.mubr.f32.gmra.mxu0 %v38
    %v109 = vpop.f32.mrf.mxu0
    %v110 = vadd.f32 0.0, %v109
    %v111 = vpop.f32.mrf.mxu0
    %112 = vmatprep.mubr.f32.mxu0 0.0
    %113 = vmatmul.mubr.f32.gmra.mxu0 %v41
    %v114 = vpop.f32.mrf.mxu0
    %v115 = vadd.f32 0.0, %v114
    %v116 = vpop.f32.mrf.mxu0
    %117 = vdwg.mxu0
    %118 = vst [vmem:[#allocation2] sm:$0xff] %v110
    %119 = vst [vmem:[#allocation2 + $0x8] sm:$0xff] %v115
    // Predicated region
    $region10: #{user_id_representation.3} parent=1 // pred_check
      _
    $region11: #{user_id_representation.3} parent=1 // pred_check_branch
      %121 = sbr.rel (0) target = $region13
    $region12: #{user_id_representation.3} parent=1 // pred_region
      %s123 = ssub.s32 256, 256
      %124 = vsyncadd [#allocation3], %s123
      %s125 = sshll.u32 [#allocation2], 4
      %s126 = int_to_ptr.vmem [resolvable:$true] %s125
      %131 = dma.vmem_to_hbm [thread:$0]  %s126, 256, %s2, [#allocation3], 128, 128, 8
    $region13: #{user_id_representation.3} parent=1 // pred_fallthru
      _
    // Predicated region
    $region14: #{user_id_representation.3} parent=1 // pred_check
      _
    $region15: #{user_id_representation.3} parent=1 // pred_check_branch
      %133 = sbr.rel (0) target = $region17
    $region16: #{user_id_representation.3} parent=1 // pred_region
      %134 = dma.done [#allocation3], 256
    $region17: #{user_id_representation.3} parent=1 // pred_fallthru
      _
    %135 = vsyncpa [#allocation3], 1

// kernel: user_id_representation.2
$region0: #{user_id_representation.2}
  #allocation0 [shape = 'u32[]', space=smem, size = 0x4, offset = 0x4, fixed_abs, tag = 'smem constant byte address 0x4 - core index']
  #allocation1 [shape = 'u32[144,128]{1,0:T(1,128)}', space=vmem, size = 0x12000, scoped, tag = 'internal scratch']
  %s0 = inlined_call_operand.vmem [shape: f32[64,32], index: 0, kind: input, shape index: {}]
  %s1 = inlined_call_operand.vmem [shape: f32[32,128], index: 1, kind: input, shape index: {}]
  %s2 = inlined_call_operand.vmem [shape: f32[3,128], index: 2, kind: input, shape index: {}]
  %s3 = inlined_call_operand.vmem [shape: f32[64,128], index: 3, kind: output, shape index: {}]
  %s4 = sld [smem:[#allocation0]]
  $region22: #{user_id_representation.2} parent=0
    _
  %s6 = ssub.s32 1, %s4
  %s7 = scalar_select 0, %s6, %s4
  // Predicated region
  $region2: #{user_id_representation.2} parent=0 // pred_check
    _
  $region3: #{user_id_representation.2} parent=0 // pred_check_branch
    %9 = sbr.rel (0) target = $region5
  $region4: #{user_id_representation.2} parent=0 // pred_region
    _
  $region5: #{user_id_representation.2} parent=0 // pred_fallthru
    _
  // Predicated region
  $region6: #{user_id_representation.2} parent=0 // pred_check
    _
  $region7: #{user_id_representation.2} parent=0 // pred_check_branch
    %11 = sbr.rel (0) target = $region9
  $region8: #{user_id_representation.2} parent=0 // pred_region
    _
  $region9: #{user_id_representation.2} parent=0 // pred_fallthru
    _
  // Predicated region
  $region10: #{user_id_representation.2} parent=0 // pred_check
    _
  $region11: #{user_id_representation.2} parent=0 // pred_check_branch
    %13 = sbr.rel (0) target = $region13
  $region12: #{user_id_representation.2} parent=0 // pred_region
    _
  $region13: #{user_id_representation.2} parent=0 // pred_fallthru
    _
  %v14 = vld [vmem:[%s0] sm:$0xff]
  %v15 = vld [vmem:[%s0 + $0x8] sm:$0xff]
  %v16 = vld [vmem:[%s0 + $0x10] sm:$0xff]
  %v17 = vld [vmem:[%s0 + $0x18] sm:$0xff]
  %v18 = vld [vmem:[%s0 + $0x20] sm:$0xff]
  %v19 = vld [vmem:[%s0 + $0x28] sm:$0xff]
  %v20 = vld [vmem:[%s0 + $0x30] sm:$0xff]
  %v21 = vld [vmem:[%s0 + $0x38] sm:$0xff]
  %v22 = vld [vmem:[%s1] sm:$0xff]
  %v23 = vld [vmem:[%s1 + $0x8] sm:$0xff]
  %v24 = vld [vmem:[%s1 + $0x10] sm:$0xff]
  %v25 = vld [vmem:[%s1 + $0x18] sm:$0xff]
  %v26 = vld [vmem:[%s2] sm:$0x7]
  %v27 = vlaneseq
  %v28 = vshrl.u32 %v27, 7
  %v29 = vsub.s32 0, %v28
  %v30 = vrot.slane %v26, %v29
  %vm31 = vcmask 261120
  %v33 = vsel %vm31, %v14, 0
  %v36 = vsel %vm31, %v15, 0
  %v39 = vsel %vm31, %v16, 0
  %v42 = vsel %vm31, %v17, 0
  %v45 = vsel %vm31, %v18, 0
  %v48 = vsel %vm31, %v19, 0
  %v51 = vsel %vm31, %v20, 0
  %v54 = vsel %vm31, %v21, 0
  %56 = vmatprep.subr.mxu0 0.0
  %57 = vmatpush1.msra.mxu0 0.0
  %58 = vmatprep.subr.mxu0 0.0
  %59 = vmatpush1.msra.mxu0 0.0
  %60 = vmatprep.subr.mxu0 0.0
  %61 = vmatpush1.msra.mxu0 0.0
  %62 = vmatprep.subr.mxu0 0.0
  %63 = vmatpush1.msra.mxu0 0.0
  %64 = vmatprep.subr.mxu0 0.0
  %65 = vmatpush1.msra.mxu0 0.0
  %66 = vmatprep.subr.mxu0 0.0
  %67 = vmatpush1.msra.mxu0 0.0
  %68 = vmatprep.subr.mxu0 0.0
  %69 = vmatpush1.msra.mxu0 0.0
  %70 = vmatprep.subr.mxu0 0.0
  %71 = vmatpush1.msra.mxu0 0.0
  %72 = vmatprep.subr.mxu0 0.0
  %73 = vmatpush1.msra.mxu0 0.0
  %74 = vmatprep.subr.mxu0 0.0
  %75 = vmatpush1.msra.mxu0 0.0
  %76 = vmatprep.subr.mxu0 0.0
  %77 = vmatpush1.msra.mxu0 0.0
  %78 = vmatprep.subr.mxu0 0.0
  %79 = vmatpush1.msra.mxu0 0.0
  %80 = vmatprep.subr.mxu0 0.0
  %81 = vmatpush1.msra.mxu0 %v25
  %82 = vmatprep.subr.mxu0 0.0
  %83 = vmatpush1.msra.mxu0 %v24
  %84 = vmatprep.subr.mxu0 0.0
  %85 = vmatpush1.msra.mxu0 %v23
  %86 = vmatprep.subr.mxu0 0.0
  %87 = vmatpush1.msra.mxu0 %v22
  %88 = vmatprep.subr.mxu0 0.0
  %89 = vmatpush2.msra.mxu0 0.0
  %90 = vmatprep.subr.mxu0 0.0
  %91 = vmatpush2.msra.mxu0 0.0
  %92 = vmatprep.subr.mxu0 0.0
  %93 = vmatpush2.msra.mxu0 0.0
  %94 = vmatprep.subr.mxu0 0.0
  %95 = vmatpush2.msra.mxu0 0.0
  %96 = vmatprep.subr.mxu0 0.0
  %97 = vmatpush2.msra.mxu0 0.0
  %98 = vmatprep.subr.mxu0 0.0
  %99 = vmatpush2.msra.mxu0 0.0
  %100 = vmatprep.subr.mxu0 0.0
  %101 = vmatpush2.msra.mxu0 0.0
  %102 = vmatprep.subr.mxu0 0.0
  %103 = vmatpush2.msra.mxu0 0.0
  %104 = vmatprep.subr.mxu0 0.0
  %105 = vmatpush2.msra.mxu0 0.0
  %106 = vmatprep.subr.mxu0 0.0
  %107 = vmatpush2.msra.mxu0 0.0
  %108 = vmatprep.subr.mxu0 0.0
  %109 = vmatpush2.msra.mxu0 0.0
  %110 = vmatprep.subr.mxu0 0.0
  %111 = vmatpush2.msra.mxu0 0.0
  %112 = vmatprep.subr.mxu0 0.0
  %113 = vmatpush2.msra.mxu0 0.0
  %114 = vmatprep.subr.mxu0 0.0
  %115 = vmatpush2.msra.mxu0 0.0
  %116 = vmatprep.subr.mxu0 0.0
  %117 = vmatpush2.msra.mxu0 0.0
  %118 = vmatprep.subr.mxu0 0.0
  %119 = vmatpush2.msra.mxu0 0.0
  %120 = vmatprep.mubr.f32.mxu0 0.0
  %121 = vmatmul.mubr.f32.gmra.mxu0 %v33
  %v122 = vpop.f32.mrf.mxu0
  %v123 = vadd.f32 %v30, %v122
  %v124 = vpop.f32.mrf.mxu0
  %125 = vmatprep.mubr.f32.mxu0 0.0
  %126 = vmatmul.mubr.f32.gmra.mxu0 %v36
  %v127 = vpop.f32.mrf.mxu0
  %v128 = vadd.f32 %v30, %v127
  %v129 = vpop.f32.mrf.mxu0
  %130 = vmatprep.mubr.f32.mxu0 0.0
  %131 = vmatmul.mubr.f32.gmra.mxu0 %v39
  %v132 = vpop.f32.mrf.mxu0
  %v133 = vadd.f32 %v30, %v132
  %v134 = vpop.f32.mrf.mxu0
  %135 = vmatprep.mubr.f32.mxu0 0.0
  %136 = vmatmul.mubr.f32.gmra.mxu0 %v42
  %v137 = vpop.f32.mrf.mxu0
  %v138 = vadd.f32 %v30, %v137
  %v139 = vpop.f32.mrf.mxu0
  %140 = vmatprep.mubr.f32.mxu0 0.0
  %141 = vmatmul.mubr.f32.gmra.mxu0 %v45
  %v142 = vpop.f32.mrf.mxu0
  %v143 = vadd.f32 %v30, %v142
  %v144 = vpop.f32.mrf.mxu0
  %145 = vmatprep.mubr.f32.mxu0 0.0
  %146 = vmatmul.mubr.f32.gmra.mxu0 %v48
  %v147 = vpop.f32.mrf.mxu0
  %v148 = vadd.f32 %v30, %v147
  %v149 = vpop.f32.mrf.mxu0
  %150 = vmatprep.mubr.f32.mxu0 0.0
  %151 = vmatmul.mubr.f32.gmra.mxu0 %v51
  %v152 = vpop.f32.mrf.mxu0
  %v153 = vadd.f32 %v30, %v152
  %v154 = vpop.f32.mrf.mxu0
  %155 = vmatprep.mubr.f32.mxu0 0.0
  %156 = vmatmul.mubr.f32.gmra.mxu0 %v54
  %v157 = vpop.f32.mrf.mxu0
  %v158 = vadd.f32 %v30, %v157
  %v159 = vpop.f32.mrf.mxu0
  %160 = vdwg.mxu0
  %v161 = vmax.f32 %v123, 0.0
  %v162 = vmax.f32 %v128, 0.0
  %v163 = vmax.f32 %v133, 0.0
  %v164 = vmax.f32 %v138, 0.0
  %v165 = vmax.f32 %v143, 0.0
  %v166 = vmax.f32 %v148, 0.0
  %v167 = vmax.f32 %v153, 0.0
  %v168 = vmax.f32 %v158, 0.0
  %169 = vadd.xlane.f32.xlu0 %v161
  %v170 = vpop.xlane.xlu0 %169
  %171 = vadd.xlane.f32.xlu0 %v162
  %v172 = vpop.xlane.xlu0 %171
  %173 = vadd.xlane.f32.xlu0 %v163
  %v174 = vpop.xlane.xlu0 %173
  %175 = vadd.xlane.f32.xlu0 %v164
  %v176 = vpop.xlane.xlu0 %175
  %177 = vadd.xlane.f32.xlu0 %v165
  %v178 = vpop.xlane.xlu0 %177
  %179 = vadd.xlane.f32.xlu0 %v166
  %v180 = vpop.xlane.xlu0 %179
  %181 = vadd.xlane.f32.xlu0 %v167
  %v182 = vpop.xlane.xlu0 %181
  %183 = vadd.xlane.f32.xlu0 %v168
  %v184 = vpop.xlane.xlu0 %183
  %v185 = vrcp.pop 128.0
  %v186 = vmul.f32 %v170, %v185
  %v187 = vmul.f32 %v172, %v185
  %v188 = vmul.f32 %v174, %v185
  %v189 = vmul.f32 %v176, %v185
  %v190 = vmul.f32 %v178, %v185
  %v191 = vmul.f32 %v180, %v185
  %v192 = vmul.f32 %v182, %v185
  %v193 = vmul.f32 %v184, %v185
  %v194 = vsub.f32 %v161, %v186
  %v195 = vsub.f32 %v162, %v187
  %v196 = vsub.f32 %v163, %v188
  %v197 = vsub.f32 %v164, %v189
  %v198 = vsub.f32 %v165, %v190
  %v199 = vsub.f32 %v166, %v191
  %v200 = vsub.f32 %v167, %v192
  %v201 = vsub.f32 %v168, %v193
  %v202 = vmul.f32 %v194, %v194
  %v203 = vmul.f32 %v195, %v195
  %v204 = vmul.f32 %v196, %v196
  %v205 = vmul.f32 %v197, %v197
  %v206 = vmul.f32 %v198, %v198
  %v207 = vmul.f32 %v199, %v199
  %v208 = vmul.f32 %v200, %v200
  %v209 = vmul.f32 %v201, %v201
  %210 = vadd.xlane.f32.xlu0 %v202
  %v211 = vpop.xlane.xlu0 %210
  %212 = vadd.xlane.f32.xlu0 %v203
  %v213 = vpop.xlane.xlu0 %212
  %214 = vadd.xlane.f32.xlu0 %v204
  %v215 = vpop.xlane.xlu0 %214
  %216 = vadd.xlane.f32.xlu0 %v205
  %v217 = vpop.xlane.xlu0 %216
  %218 = vadd.xlane.f32.xlu0 %v206
  %v219 = vpop.xlane.xlu0 %218
  %220 = vadd.xlane.f32.xlu0 %v207
  %v221 = vpop.xlane.xlu0 %220
  %222 = vadd.xlane.f32.xlu0 %v208
  %v223 = vpop.xlane.xlu0 %222
  %224 = vadd.xlane.f32.xlu0 %v209
  %v225 = vpop.xlane.xlu0 %224
  %v226 = vmul.f32 %v211, %v185
  %v227 = vmul.f32 %v213, %v185
  %v228 = vmul.f32 %v215, %v185
  %v229 = vmul.f32 %v217, %v185
  %v230 = vmul.f32 %v219, %v185
  %v231 = vmul.f32 %v221, %v185
  %v232 = vmul.f32 %v223, %v185
  %v233 = vmul.f32 %v225, %v185
  %v234 = vadd.f32 %v226, 1e-05
  %v235 = vadd.f32 %v227, 1e-05
  %v236 = vadd.f32 %v228, 1e-05
  %v237 = vadd.f32 %v229, 1e-05
  %v238 = vadd.f32 %v230, 1e-05
  %v239 = vadd.f32 %v231, 1e-05
  %v240 = vadd.f32 %v232, 1e-05
  %v241 = vadd.f32 %v233, 1e-05
  %v242 = vrsqrt.pop %v234
  %v243 = vrsqrt.pop %v235
  %v244 = vrsqrt.pop %v236
  %v245 = vrsqrt.pop %v237
  %v246 = vrsqrt.pop %v238
  %v247 = vrsqrt.pop %v239
  %v248 = vrsqrt.pop %v240
  %v249 = vrsqrt.pop %v241
  %v250 = vmul.f32 %v194, %v242
  %v251 = vmul.f32 %v195, %v243
  %v252 = vmul.f32 %v196, %v244
  %v253 = vmul.f32 %v197, %v245
  %v254 = vmul.f32 %v198, %v246
  %v255 = vmul.f32 %v199, %v247
  %v256 = vmul.f32 %v200, %v248
  %v257 = vmul.f32 %v201, %v249
  %v258 = vlaneseq
  %v259 = vshrl.u32 %v258, 7
  %v260 = vsub.s32 1, %v259
  %v261 = vrot.slane %v26, %v260
  %v262 = vmul.f32 %v250, %v261
  %v263 = vmul.f32 %v251, %v261
  %v264 = vmul.f32 %v252, %v261
  %v265 = vmul.f32 %v253, %v261
  %v266 = vmul.f32 %v254, %v261
  %v267 = vmul.f32 %v255, %v261
  %v268 = vmul.f32 %v256, %v261
  %v269 = vmul.f32 %v257, %v261
  %v270 = vlaneseq
  %v271 = vshrl.u32 %v270, 7
  %v272 = vsub.s32 2, %v271
  %v273 = vrot.slane %v26, %v272
  %v274 = vadd.f32 %v262, %v273
  %v275 = vadd.f32 %v263, %v273
  %v276 = vadd.f32 %v264, %v273
  %v277 = vadd.f32 %v265, %v273
  %v278 = vadd.f32 %v266, %v273
  %v279 = vadd.f32 %v267, %v273
  %v280 = vadd.f32 %v268, %v273
  %v281 = vadd.f32 %v269, %v273
  %282 = vst [vmem:[%s3] sm:$0xff] %v274
  %283 = vst [vmem:[%s3 + $0x8] sm:$0xff] %v275
  %284 = vst [vmem:[%s3 + $0x10] sm:$0xff] %v276
  %285 = vst [vmem:[%s3 + $0x18] sm:$0xff] %v277
  %286 = vst [vmem:[%s3 + $0x20] sm:$0xff] %v278
  %287 = vst [vmem:[%s3 + $0x28] sm:$0xff] %v279
  %288 = vst [vmem:[%s3 + $0x30] sm:$0xff] %v280
  %289 = vst [vmem:[%s3 + $0x38] sm:$0xff] %v281
  // Predicated region
  $region14: #{user_id_representation.2} parent=0 // pred_check
    _
  $region15: #{user_id_representation.2} parent=0 // pred_check_branch
    %291 = sbr.rel (0) target = $region17
  $region16: #{user_id_representation.2} parent=0 // pred_region
    _
  $region17: #{user_id_representation.2} parent=0 // pred_fallthru
    _
  // Predicated region
  $region18: #{user_id_representation.2} parent=0 // pred_check
    _
  $region19: #{user_id_representation.2} parent=0 // pred_check_branch
    %293 = sbr.rel (0) target = $region21
  $region20: #{user_id_representation.2} parent=0 // pred_region
    _
  $region21: #{user_id_representation.2} parent=0 // pred_fallthru
    _

</llo_original>
